<compile_context>
chip_gen: v6e
topology: v6e:2x2x1
jax: 0.10.0
libtpu: 0.0.40
codegen_flags: <defaults>
</compile_context>

<pallas_src>
import jax
import jax.numpy as jnp
from jax.experimental import pallas as pl
from jax.experimental.pallas import tpu as pltpu


ELU_ALPHA = 1.0
ELU_SHIFT = 0.001
ELU_EPS = 1e-7


def umal_kernel(x_ref,
                w1_ref, b1_ref,
                w2_ref, b2_ref,
                w3_ref, b3_ref,
                wh_ref, bh_ref,
                out_ref):
    # Batch-on-lanes layout: x_ref is [F, TB], weights are [out, in],
    # biases are [out, 1] (lane-broadcast).  All matmuls accumulate in f32
    # on the MXU; elementwise math stays f32 (v5e has no bf16 VPU/EUP).
    x = x_ref[...]                                                   # [F, TB]
    h = jnp.dot(w1_ref[...], x, preferred_element_type=jnp.float32) + b1_ref[...]
    h = jnp.maximum(h, 0.0)                                          # [120, TB]
    h = jnp.dot(w2_ref[...], h, preferred_element_type=jnp.float32) + b2_ref[...]
    h = jnp.maximum(h, 0.0)                                          # [60, TB]
    h = jnp.dot(w3_ref[...], h, preferred_element_type=jnp.float32) + b3_ref[...]
    h = jnp.maximum(h, 0.0)                                          # [10, TB]

    # Fused heads: [2,10] @ [10,TB]; row 0 = mu, row 1 = pre-ELU b.
    z = jnp.dot(wh_ref[...], h, preferred_element_type=jnp.float32) + bh_ref[...]

    mu = z[0:1, :]                                                   # [1, TB]
    # modified ELU on the b row only: elu(z + shift) + 1 + eps
    zs = z[1:2, :] + ELU_SHIFT
    elu = jnp.where(zs > 0.0, zs,
                    ELU_ALPHA * (jnp.exp(jnp.minimum(zs, 0.0)) - 1.0))
    b_row = elu + 1.0 + ELU_EPS                                      # [1, TB]

    out_ref[0:1, :] = mu.astype(out_ref.dtype)
    out_ref[1:2, :] = b_row.astype(out_ref.dtype)


def _round_up(n, m):
    return ((n + m - 1) // m) * m


def _choose_batch_tile(B, max_batch_tile):
    """Lane-aligned batch tile: big (amortize per-step overhead) but split
    into >=4 grid steps for large batches so v7x megacore gets work."""
    lane_B = _round_up(B, 128)
    tb = min(max_batch_tile, lane_B)
    quarter = _round_up(pl.cdiv(lane_B, 4), 128)
    tb = min(tb, max(512, quarter))
    return max(tb, 128)


def umal_forward(x, params, *, max_batch_tile=8192):
    """Fused UMAL forward pass.  Returns (mu, b), each [B, 1] f32."""
    (w1, b1, w2, b2, w3, b3, wmu, bmu, wb, bb) = params
    B, F = x.shape

    # Relayout params to [out, in] weights / [out, 1] biases, fuse the heads.
    w1_t, w2_t, w3_t = w1.T, w2.T, w3.T
    b1_t, b2_t, b3_t = b1.reshape(-1, 1), b2.reshape(-1, 1), b3.reshape(-1, 1)
    wh_t = jnp.concatenate([wmu.T, wb.T], axis=0)                    # [2, 10]
    bh_t = jnp.concatenate([bmu.reshape(1, 1), bb.reshape(1, 1)], axis=0)  # [2, 1]

    TB = _choose_batch_tile(B, max_batch_tile)
    padded_B = _round_up(B, TB)
    grid = (padded_B // TB,)

    # Transpose to batch-on-lanes and pad the lane axis (zero columns flow
    # harmlessly through relu/elu and are sliced away below).
    x_t = x.T                                                        # [F, B]
    if padded_B != B:
        x_t = jnp.pad(x_t, ((0, 0), (0, padded_B - B)))

    weights = (w1_t, b1_t, w2_t, b2_t, w3_t, b3_t, wh_t, bh_t)

    # Weights / biases are tiny: keep them VMEM-resident across the grid.
    # TODO(synk): pipeline_mode=pl.Buffered(1) on the resident specs would
    # drop their double buffers; skipped to keep lowering maximally portable.
    def resident_spec(a):
        return pl.BlockSpec(a.shape, lambda i: (0, 0))

    in_specs = ([pl.BlockSpec((F, TB), lambda i: (0, i))]
                + [resident_spec(w) for w in weights])
    out_specs = pl.BlockSpec((2, TB), lambda i: (0, i))
    out_shape = jax.ShapeDtypeStruct((2, padded_B), jnp.float32)

    flops = 2 * padded_B * (F * 120 + 120 * 60 + 60 * 10 + 10 * 2)
    bytes_accessed = (int(x_t.size) * x_t.dtype.itemsize
                      + 2 * padded_B * 4
                      + sum(int(a.size) * a.dtype.itemsize for a in weights))

    out = pl.pallas_call(
        umal_kernel,
        out_shape=out_shape,
        grid=grid,
        in_specs=in_specs,
        out_specs=out_specs,
        compiler_params=pltpu.CompilerParams(
            dimension_semantics=("parallel",)),
        cost_estimate=pl.CostEstimate(
            flops=flops,
            transcendentals=padded_B,
            bytes_accessed=bytes_accessed),
    )(x_t, *weights)

    mu = out[0, :B].reshape(B, 1)
    b = out[1, :B].reshape(B, 1)
    return mu, b


def init_linear_params(key, fan_in, fan_out):
    """PyTorch-style Linear init: U(-1/sqrt(fan_in), 1/sqrt(fan_in))."""
    kw, kb = jax.random.split(key)
    bound = 1.0 / jnp.sqrt(jnp.float32(fan_in))
    # stored as [in, out] so the reference does x @ W (PyTorch x @ W.T + b)
    w = jax.random.uniform(kw, (fan_in, fan_out), jnp.float32, -bound, bound)
    b = jax.random.uniform(kb, (1, fan_out), jnp.float32, -bound, bound)
    return w, b


def init_umal_params(key, n_dim):
    keys = jax.random.split(key, 5)
    w1, b1 = init_linear_params(keys[0], n_dim + 1, 120)
    w2, b2 = init_linear_params(keys[1], 120, 60)
    w3, b3 = init_linear_params(keys[2], 60, 10)
    wmu, bmu = init_linear_params(keys[3], 10, 1)
    wb, bb = init_linear_params(keys[4], 10, 1)
    return (w1, b1, w2, b2, w3, b3, wmu, bmu, wb, bb)


def umal_forward_ref(x, params):
    (w1, b1, w2, b2, w3, b3, wmu, bmu, wb, bb) = params
    h = jnp.maximum(x @ w1 + b1, 0.0)
    h = jnp.maximum(h @ w2 + b2, 0.0)
    h = jnp.maximum(h @ w3 + b3, 0.0)
    mu = h @ wmu + bmu
    z = h @ wb + bb + ELU_SHIFT
    b = jnp.where(z > 0.0,
                  z,
                  ELU_ALPHA * (jnp.exp(jnp.minimum(z, 0.0)) - 1.0)) + 1.0 + ELU_EPS
    return mu, b


if __name__ == "__main__":
    n_dim = 4          # model input feature dim (network takes n_dim + 1 features)
    batch = 8

    key = jax.random.PRNGKey(0)
    k_params, k_x, k_x2 = jax.random.split(key, 3)

    params = init_umal_params(k_params, n_dim)
    x = jax.random.normal(k_x, (batch, n_dim + 1), jnp.float32)

    fwd = jax.jit(umal_forward, static_argnames=("max_batch_tile",))

    # Small-batch path (single grid step, TB == 128 lane tile).
    mu, b = fwd(x, params)
    jax.block_until_ready(mu)
    jax.block_until_ready(b)

    mu_ref, b_ref = umal_forward_ref(x, params)
    assert mu.shape == (batch, 1) and b.shape == (batch, 1)
    assert jnp.allclose(mu, mu_ref, atol=1e-5, rtol=1e-5)
    assert jnp.allclose(b, b_ref, atol=1e-5, rtol=1e-5)
    # b = elu(.) + 1 + eps must be strictly positive
    assert bool(jnp.all(b > 0.0))

    # Larger batch: multi-step grid (pipelined x DMA, parallel batch axis).
    batch2 = 3000
    x2 = jax.random.normal(k_x2, (batch2, n_dim + 1), jnp.float32)
    mu2, b2 = fwd(x2, params, max_batch_tile=512)
    jax.block_until_ready(mu2)
    jax.block_until_ready(b2)
    mu2_ref, b2_ref = umal_forward_ref(x2, params)
    assert mu2.shape == (batch2, 1) and b2.shape == (batch2, 1)
    assert jnp.allclose(mu2, mu2_ref, atol=1e-5, rtol=1e-5)
    assert jnp.allclose(b2, b2_ref, atol=1e-5, rtol=1e-5)
    assert bool(jnp.all(b2 > 0.0))

    print("KERNEL_OK")
</pallas_src>

<mosaic_0001>
module attributes {stable_mosaic.version = 11 : i64} {
  func.func @umal_kernel(%arg0: i32, %arg1: memref<5x128xf32, #tpu.memory_space<vmem>>, %arg2: memref<120x5xf32, #tpu.memory_space<vmem>>, %arg3: memref<120x1xf32, #tpu.memory_space<vmem>>, %arg4: memref<60x120xf32, #tpu.memory_space<vmem>>, %arg5: memref<60x1xf32, #tpu.memory_space<vmem>>, %arg6: memref<10x60xf32, #tpu.memory_space<vmem>>, %arg7: memref<10x1xf32, #tpu.memory_space<vmem>>, %arg8: memref<2x10xf32, #tpu.memory_space<vmem>>, %arg9: memref<2x1xf32, #tpu.memory_space<vmem>>, %arg10: memref<2x128xf32, #tpu.memory_space<vmem>>) attributes {dimension_semantics = [#tpu.dimension_semantics<parallel>], iteration_bounds = array<i64: 1>, scalar_prefetch = 0 : i64, scratch_operands = 0 : i64, tpu.core_type = #tpu.core_type<tc>, window_params = [{transform_indices = @transform_0, window_bounds = array<i64: 5, 128>}, {pipeline_mode = #tpu.pipeline_mode<synchronous>, transform_indices = @transform_1, window_bounds = array<i64: 120, 5>}, {pipeline_mode = #tpu.pipeline_mode<synchronous>, transform_indices = @transform_2, window_bounds = array<i64: 120, 1>}, {pipeline_mode = #tpu.pipeline_mode<synchronous>, transform_indices = @transform_3, window_bounds = array<i64: 60, 120>}, {pipeline_mode = #tpu.pipeline_mode<synchronous>, transform_indices = @transform_4, window_bounds = array<i64: 60, 1>}, {pipeline_mode = #tpu.pipeline_mode<synchronous>, transform_indices = @transform_5, window_bounds = array<i64: 10, 60>}, {pipeline_mode = #tpu.pipeline_mode<synchronous>, transform_indices = @transform_6, window_bounds = array<i64: 10, 1>}, {pipeline_mode = #tpu.pipeline_mode<synchronous>, transform_indices = @transform_7, window_bounds = array<i64: 2, 10>}, {pipeline_mode = #tpu.pipeline_mode<synchronous>, transform_indices = @transform_8, window_bounds = array<i64: 2, 1>}, {transform_indices = @transform_9, window_bounds = array<i64: 2, 128>}]} {
    %c0 = arith.constant 0 : index
    %c0_0 = arith.constant 0 : index
    %0 = vector.load %arg1[%c0, %c0_0] : memref<5x128xf32, #tpu.memory_space<vmem>>, vector<5x128xf32>
    %c0_1 = arith.constant 0 : index
    %c0_2 = arith.constant 0 : index
    %1 = vector.load %arg2[%c0_1, %c0_2] : memref<120x5xf32, #tpu.memory_space<vmem>>, vector<120x5xf32>
    %cst = arith.constant dense<0.000000e+00> : vector<120x128xf32>
    %2 = tpu.matmul %1, %0, %cst {dimension_numbers = #tpu.dot_dimension_numbers<[1], [0], [0], [1], [0, 0, 1, 1], [], []>} : vector<120x5xf32>, vector<5x128xf32>, vector<120x128xf32> -> vector<120x128xf32>
    %c0_3 = arith.constant 0 : index
    %c0_4 = arith.constant 0 : index
    %3 = vector.load %arg3[%c0_3, %c0_4] : memref<120x1xf32, #tpu.memory_space<vmem>>, vector<120x1xf32>
    %4 = vector.broadcast %3 : vector<120x1xf32> to vector<120x128xf32>
    %5 = arith.addf %2, %4 : vector<120x128xf32>
    %cst_5 = arith.constant 0.000000e+00 : f32
    %6 = vector.broadcast %cst_5 : f32 to vector<120x128xf32>
    %7 = arith.maximumf %5, %6 : vector<120x128xf32>
    %c0_6 = arith.constant 0 : index
    %c0_7 = arith.constant 0 : index
    %8 = vector.load %arg4[%c0_6, %c0_7] : memref<60x120xf32, #tpu.memory_space<vmem>>, vector<60x120xf32>
    %cst_8 = arith.constant dense<0.000000e+00> : vector<60x128xf32>
    %9 = tpu.matmul %8, %7, %cst_8 {dimension_numbers = #tpu.dot_dimension_numbers<[1], [0], [0], [1], [0, 0, 1, 1], [], []>} : vector<60x120xf32>, vector<120x128xf32>, vector<60x128xf32> -> vector<60x128xf32>
    %c0_9 = arith.constant 0 : index
    %c0_10 = arith.constant 0 : index
    %10 = vector.load %arg5[%c0_9, %c0_10] : memref<60x1xf32, #tpu.memory_space<vmem>>, vector<60x1xf32>
    %11 = vector.broadcast %10 : vector<60x1xf32> to vector<60x128xf32>
    %12 = arith.addf %9, %11 : vector<60x128xf32>
    %cst_11 = arith.constant 0.000000e+00 : f32
    %13 = vector.broadcast %cst_11 : f32 to vector<60x128xf32>
    %14 = arith.maximumf %12, %13 : vector<60x128xf32>
    %c0_12 = arith.constant 0 : index
    %c0_13 = arith.constant 0 : index
    %15 = vector.load %arg6[%c0_12, %c0_13] : memref<10x60xf32, #tpu.memory_space<vmem>>, vector<10x60xf32>
    %cst_14 = arith.constant dense<0.000000e+00> : vector<10x128xf32>
    %16 = tpu.matmul %15, %14, %cst_14 {dimension_numbers = #tpu.dot_dimension_numbers<[1], [0], [0], [1], [0, 0, 1, 1], [], []>} : vector<10x60xf32>, vector<60x128xf32>, vector<10x128xf32> -> vector<10x128xf32>
    %c0_15 = arith.constant 0 : index
    %c0_16 = arith.constant 0 : index
    %17 = vector.load %arg7[%c0_15, %c0_16] : memref<10x1xf32, #tpu.memory_space<vmem>>, vector<10x1xf32>
    %18 = vector.broadcast %17 : vector<10x1xf32> to vector<10x128xf32>
    %19 = arith.addf %16, %18 : vector<10x128xf32>
    %cst_17 = arith.constant 0.000000e+00 : f32
    %20 = vector.broadcast %cst_17 : f32 to vector<10x128xf32>
    %21 = arith.maximumf %19, %20 : vector<10x128xf32>
    %c0_18 = arith.constant 0 : index
    %c0_19 = arith.constant 0 : index
    %22 = vector.load %arg8[%c0_18, %c0_19] : memref<2x10xf32, #tpu.memory_space<vmem>>, vector<2x10xf32>
    %cst_20 = arith.constant dense<0.000000e+00> : vector<2x128xf32>
    %23 = tpu.matmul %22, %21, %cst_20 {dimension_numbers = #tpu.dot_dimension_numbers<[1], [0], [0], [1], [0, 0, 1, 1], [], []>} : vector<2x10xf32>, vector<10x128xf32>, vector<2x128xf32> -> vector<2x128xf32>
    %c0_21 = arith.constant 0 : index
    %c0_22 = arith.constant 0 : index
    %24 = vector.load %arg9[%c0_21, %c0_22] : memref<2x1xf32, #tpu.memory_space<vmem>>, vector<2x1xf32>
    %25 = vector.broadcast %24 : vector<2x1xf32> to vector<2x128xf32>
    %26 = arith.addf %23, %25 : vector<2x128xf32>
    %27 = vector.extract_strided_slice %26 {offsets = [0, 0], sizes = [1, 128], strides = [1, 1]} : vector<2x128xf32> to vector<1x128xf32>
    %28 = vector.extract_strided_slice %26 {offsets = [1, 0], sizes = [1, 128], strides = [1, 1]} : vector<2x128xf32> to vector<1x128xf32>
    %cst_23 = arith.constant 1.000000e-03 : f32
    %29 = vector.broadcast %cst_23 : f32 to vector<1x128xf32>
    %30 = arith.addf %28, %29 : vector<1x128xf32>
    %cst_24 = arith.constant 0.000000e+00 : f32
    %31 = vector.broadcast %cst_24 : f32 to vector<1x128xf32>
    %32 = arith.cmpf ogt, %30, %31 : vector<1x128xf32>
    %cst_25 = arith.constant 0.000000e+00 : f32
    %33 = vector.broadcast %cst_25 : f32 to vector<1x128xf32>
    %34 = arith.minimumf %30, %33 : vector<1x128xf32>
    %35 = math.exp %34 : vector<1x128xf32>
    %cst_26 = arith.constant 1.000000e+00 : f32
    %36 = vector.broadcast %cst_26 : f32 to vector<1x128xf32>
    %37 = arith.subf %35, %36 : vector<1x128xf32>
    %cst_27 = arith.constant 1.000000e+00 : f32
    %38 = vector.broadcast %cst_27 : f32 to vector<1x128xf32>
    %39 = arith.mulf %38, %37 : vector<1x128xf32>
    %40 = arith.select %32, %30, %39 : vector<1x128xi1>, vector<1x128xf32>
    %cst_28 = arith.constant 1.000000e+00 : f32
    %41 = vector.broadcast %cst_28 : f32 to vector<1x128xf32>
    %42 = arith.addf %40, %41 : vector<1x128xf32>
    %cst_29 = arith.constant 1.000000e-07 : f32
    %43 = vector.broadcast %cst_29 : f32 to vector<1x128xf32>
    %44 = arith.addf %42, %43 : vector<1x128xf32>
    %c0_30 = arith.constant 0 : index
    %c0_31 = arith.constant 0 : index
    %45 = vector.load %arg10[%c0_30, %c0_31] : memref<2x128xf32, #tpu.memory_space<vmem>>, vector<1x128xf32>
    tpu.vector_store %arg10[%c0_30, %c0_31], %27 {strides = array<i32>} : memref<2x128xf32, #tpu.memory_space<vmem>>, vector<1x128xf32>,
    %c1 = arith.constant 1 : index
    %c0_32 = arith.constant 0 : index
    %46 = vector.load %arg10[%c1, %c0_32] : memref<2x128xf32, #tpu.memory_space<vmem>>, vector<1x128xf32>
    tpu.vector_store %arg10[%c1, %c0_32], %44 {strides = array<i32>} : memref<2x128xf32, #tpu.memory_space<vmem>>, vector<1x128xf32>,
    return
  }
  func.func @transform_0(%arg0: i32) -> (i32, i32) {
    %c0_i32 = arith.constant 0 : i32
    %c0_i32_0 = arith.constant 0 : i32
    return %c0_i32, %arg0 : i32, i32
  }
  func.func @transform_1(%arg0: i32) -> (i32, i32) {
    %c0_i32 = arith.constant 0 : i32
    %c0_i32_0 = arith.constant 0 : i32
    %c0_i32_1 = arith.constant 0 : i32
    return %c0_i32, %c0_i32_0 : i32, i32
  }
  func.func @transform_2(%arg0: i32) -> (i32, i32) {
    %c0_i32 = arith.constant 0 : i32
    %c0_i32_0 = arith.constant 0 : i32
    %c0_i32_1 = arith.constant 0 : i32
    return %c0_i32, %c0_i32_0 : i32, i32
  }
  func.func @transform_3(%arg0: i32) -> (i32, i32) {
    %c0_i32 = arith.constant 0 : i32
    %c0_i32_0 = arith.constant 0 : i32
    %c0_i32_1 = arith.constant 0 : i32
    return %c0_i32, %c0_i32_0 : i32, i32
  }
  func.func @transform_4(%arg0: i32) -> (i32, i32) {
    %c0_i32 = arith.constant 0 : i32
    %c0_i32_0 = arith.constant 0 : i32
    %c0_i32_1 = arith.constant 0 : i32
    return %c0_i32, %c0_i32_0 : i32, i32
  }
  func.func @transform_5(%arg0: i32) -> (i32, i32) {
    %c0_i32 = arith.constant 0 : i32
    %c0_i32_0 = arith.constant 0 : i32
    %c0_i32_1 = arith.constant 0 : i32
    return %c0_i32, %c0_i32_0 : i32, i32
  }
  func.func @transform_6(%arg0: i32) -> (i32, i32) {
    %c0_i32 = arith.constant 0 : i32
    %c0_i32_0 = arith.constant 0 : i32
    %c0_i32_1 = arith.constant 0 : i32
    return %c0_i32, %c0_i32_0 : i32, i32
  }
  func.func @transform_7(%arg0: i32) -> (i32, i32) {
    %c0_i32 = arith.constant 0 : i32
    %c0_i32_0 = arith.constant 0 : i32
    %c0_i32_1 = arith.constant 0 : i32
    return %c0_i32, %c0_i32_0 : i32, i32
  }
  func.func @transform_8(%arg0: i32) -> (i32, i32) {
    %c0_i32 = arith.constant 0 : i32
    %c0_i32_0 = arith.constant 0 : i32
    %c0_i32_1 = arith.constant 0 : i32
    return %c0_i32, %c0_i32_0 : i32, i32
  }
  func.func @transform_9(%arg0: i32) -> (i32, i32) {
    %c0_i32 = arith.constant 0 : i32
    %c0_i32_0 = arith.constant 0 : i32
    return %c0_i32, %arg0 : i32, i32
  }
}

</mosaic_0001>

<llo_original>
// kernel: umal_forward.1
$region0: #{umal_forward.1}
  #allocation0 [shape = 'u32[]', space=smem, size = 0x4, offset = 0x4, fixed_abs, tag = 'smem constant byte address 0x4 - core index']
  #allocation1 [shape = 'u32[144,128]{1,0:T(1,128)}', space=vmem, size = 0x12000, scoped, tag = 'internal scratch']
  %s0 = inlined_call_operand.vmem [shape: f32[5,128], index: 0, kind: input, shape index: {}]
  %s1 = inlined_call_operand.vmem [shape: f32[120,5], index: 1, kind: input, shape index: {}]
  %s2 = inlined_call_operand.vmem [shape: f32[120,1], index: 2, kind: input, shape index: {}]
  %s3 = inlined_call_operand.vmem [shape: f32[60,120], index: 3, kind: input, shape index: {}]
  %s4 = inlined_call_operand.vmem [shape: f32[60,1], index: 4, kind: input, shape index: {}]
  %s5 = inlined_call_operand.vmem [shape: f32[10,60], index: 5, kind: input, shape index: {}]
  %s6 = inlined_call_operand.vmem [shape: f32[10,1], index: 6, kind: input, shape index: {}]
  %s7 = inlined_call_operand.vmem [shape: f32[2,10], index: 7, kind: input, shape index: {}]
  %s8 = inlined_call_operand.vmem [shape: f32[2,1], index: 8, kind: input, shape index: {}]
  %s9 = inlined_call_operand.vmem [shape: f32[2,128], index: 9, kind: output, shape index: {}]
  %s10 = sld [smem:[#allocation0]]
  $region46: #{umal_forward.1} parent=0
    _
  %s12 = ssub.s32 1, %s10
  %s13 = scalar_select 0, %s12, %s10
  // Predicated region
  $region2: #{umal_forward.1} parent=0 // pred_check
    _
  $region3: #{umal_forward.1} parent=0 // pred_check_branch
    %15 = sbr.rel (0) target = $region5
  $region4: #{umal_forward.1} parent=0 // pred_region
    _
  $region5: #{umal_forward.1} parent=0 // pred_fallthru
    _
  // Predicated region
  $region6: #{umal_forward.1} parent=0 // pred_check
    _
  $region7: #{umal_forward.1} parent=0 // pred_check_branch
    %17 = sbr.rel (0) target = $region9
  $region8: #{umal_forward.1} parent=0 // pred_region
    _
  $region9: #{umal_forward.1} parent=0 // pred_fallthru
    _
  // Predicated region
  $region10: #{umal_forward.1} parent=0 // pred_check
    _
  $region11: #{umal_forward.1} parent=0 // pred_check_branch
    %19 = sbr.rel (0) target = $region13
  $region12: #{umal_forward.1} parent=0 // pred_region
    _
  $region13: #{umal_forward.1} parent=0 // pred_fallthru
    _
  // Predicated region
  $region14: #{umal_forward.1} parent=0 // pred_check
    _
  $region15: #{umal_forward.1} parent=0 // pred_check_branch
    %21 = sbr.rel (0) target = $region17
  $region16: #{umal_forward.1} parent=0 // pred_region
    _
  $region17: #{umal_forward.1} parent=0 // pred_fallthru
    _
  // Predicated region
  $region18: #{umal_forward.1} parent=0 // pred_check
    _
  $region19: #{umal_forward.1} parent=0 // pred_check_branch
    %23 = sbr.rel (0) target = $region21
  $region20: #{umal_forward.1} parent=0 // pred_region
    _
  $region21: #{umal_forward.1} parent=0 // pred_fallthru
    _
  // Predicated region
  $region22: #{umal_forward.1} parent=0 // pred_check
    _
  $region23: #{umal_forward.1} parent=0 // pred_check_branch
    %25 = sbr.rel (0) target = $region25
  $region24: #{umal_forward.1} parent=0 // pred_region
    _
  $region25: #{umal_forward.1} parent=0 // pred_fallthru
    _
  // Predicated region
  $region26: #{umal_forward.1} parent=0 // pred_check
    _
  $region27: #{umal_forward.1} parent=0 // pred_check_branch
    %27 = sbr.rel (0) target = $region29
  $region28: #{umal_forward.1} parent=0 // pred_region
    _
  $region29: #{umal_forward.1} parent=0 // pred_fallthru
    _
  // Predicated region
  $region30: #{umal_forward.1} parent=0 // pred_check
    _
  $region31: #{umal_forward.1} parent=0 // pred_check_branch
    %29 = sbr.rel (0) target = $region33
  $region32: #{umal_forward.1} parent=0 // pred_region
    _
  $region33: #{umal_forward.1} parent=0 // pred_fallthru
    _
  // Predicated region
  $region34: #{umal_forward.1} parent=0 // pred_check
    _
  $region35: #{umal_forward.1} parent=0 // pred_check_branch
    %31 = sbr.rel (0) target = $region37
  $region36: #{umal_forward.1} parent=0 // pred_region
    _
  $region37: #{umal_forward.1} parent=0 // pred_fallthru
    _
  %v32 = vld [vmem:[%s0] sm:$0x1f]
  %v33 = vld [vmem:[%s1] sm:$0xff]
  %v34 = vld [vmem:[%s1 + $0x8] sm:$0xff]
  %v35 = vld [vmem:[%s1 + $0x10] sm:$0xff]
  %v36 = vld [vmem:[%s1 + $0x18] sm:$0xff]
  %v37 = vld [vmem:[%s1 + $0x20] sm:$0xff]
  %v38 = vld [vmem:[%s1 + $0x28] sm:$0xff]
  %v39 = vld [vmem:[%s1 + $0x30] sm:$0xff]
  %v40 = vld [vmem:[%s1 + $0x38] sm:$0xff]
  %v41 = vld [vmem:[%s1 + $0x40] sm:$0xff]
  %v42 = vld [vmem:[%s1 + $0x48] sm:$0xff]
  %v43 = vld [vmem:[%s1 + $0x50] sm:$0xff]
  %v44 = vld [vmem:[%s1 + $0x58] sm:$0xff]
  %v45 = vld [vmem:[%s1 + $0x60] sm:$0xff]
  %v46 = vld [vmem:[%s1 + $0x68] sm:$0xff]
  %v47 = vld [vmem:[%s1 + $0x70] sm:$0xff]
  %v48 = vld [vmem:[%s2] sm:$0xff]
  %v49 = vld [vmem:[%s2 + $0x8] sm:$0xff]
  %v50 = vld [vmem:[%s2 + $0x10] sm:$0xff]
  %v51 = vld [vmem:[%s2 + $0x18] sm:$0xff]
  %v52 = vld [vmem:[%s2 + $0x20] sm:$0xff]
  %v53 = vld [vmem:[%s2 + $0x28] sm:$0xff]
  %v54 = vld [vmem:[%s2 + $0x30] sm:$0xff]
  %v55 = vld [vmem:[%s2 + $0x38] sm:$0xff]
  %v56 = vld [vmem:[%s2 + $0x40] sm:$0xff]
  %v57 = vld [vmem:[%s2 + $0x48] sm:$0xff]
  %v58 = vld [vmem:[%s2 + $0x50] sm:$0xff]
  %v59 = vld [vmem:[%s2 + $0x58] sm:$0xff]
  %v60 = vld [vmem:[%s2 + $0x60] sm:$0xff]
  %v61 = vld [vmem:[%s2 + $0x68] sm:$0xff]
  %v62 = vld [vmem:[%s2 + $0x70] sm:$0xff]
  %64 = vset.pattern.permute.xlu0 0
  %65 = vperm.xlu0 %64, %v48
  %v66 = vpop.permute.xlu0 %65
  %69 = vset.pattern.permute.xlu0 0
  %70 = vperm.xlu0 %69, %v49
  %v71 = vpop.permute.xlu0 %70
  %74 = vset.pattern.permute.xlu0 0
  %75 = vperm.xlu0 %74, %v50
  %v76 = vpop.permute.xlu0 %75
  %79 = vset.pattern.permute.xlu0 0
  %80 = vperm.xlu0 %79, %v51
  %v81 = vpop.permute.xlu0 %80
  %84 = vset.pattern.permute.xlu0 0
  %85 = vperm.xlu0 %84, %v52
  %v86 = vpop.permute.xlu0 %85
  %89 = vset.pattern.permute.xlu0 0
  %90 = vperm.xlu0 %89, %v53
  %v91 = vpop.permute.xlu0 %90
  %94 = vset.pattern.permute.xlu0 0
  %95 = vperm.xlu0 %94, %v54
  %v96 = vpop.permute.xlu0 %95
  %99 = vset.pattern.permute.xlu0 0
  %100 = vperm.xlu0 %99, %v55
  %v101 = vpop.permute.xlu0 %100
  %104 = vset.pattern.permute.xlu0 0
  %105 = vperm.xlu0 %104, %v56
  %v106 = vpop.permute.xlu0 %105
  %109 = vset.pattern.permute.xlu0 0
  %110 = vperm.xlu0 %109, %v57
  %v111 = vpop.permute.xlu0 %110
  %114 = vset.pattern.permute.xlu0 0
  %115 = vperm.xlu0 %114, %v58
  %v116 = vpop.permute.xlu0 %115
  %119 = vset.pattern.permute.xlu0 0
  %120 = vperm.xlu0 %119, %v59
  %v121 = vpop.permute.xlu0 %120
  %124 = vset.pattern.permute.xlu0 0
  %125 = vperm.xlu0 %124, %v60
  %v126 = vpop.permute.xlu0 %125
  %129 = vset.pattern.permute.xlu0 0
  %130 = vperm.xlu0 %129, %v61
  %v131 = vpop.permute.xlu0 %130
  %134 = vset.pattern.permute.xlu0 0
  %135 = vperm.xlu0 %134, %v62
  %v136 = vpop.permute.xlu0 %135
  %vm138 = vcmask 39936
  %v140 = vsel %vm138, %v33, 0
  %v143 = vsel %vm138, %v34, 0
  %v146 = vsel %vm138, %v35, 0
  %v149 = vsel %vm138, %v36, 0
  %v152 = vsel %vm138, %v37, 0
  %v155 = vsel %vm138, %v38, 0
  %v158 = vsel %vm138, %v39, 0
  %v161 = vsel %vm138, %v40, 0
  %v164 = vsel %vm138, %v41, 0
  %v167 = vsel %vm138, %v42, 0
  %v170 = vsel %vm138, %v43, 0
  %v173 = vsel %vm138, %v44, 0
  %v176 = vsel %vm138, %v45, 0
  %v179 = vsel %vm138, %v46, 0
  %v182 = vsel %vm138, %v47, 0
  %vm184 = vcmask 1044480
  %v186 = vsel %vm184, %v32, 0
  %188 = vmatprep.subr.mxu0 0.0
  %189 = vmatpush1.msra.mxu0 0.0
  %190 = vmatprep.subr.mxu0 0.0
  %191 = vmatpush1.msra.mxu0 0.0
  %192 = vmatprep.subr.mxu0 0.0
  %193 = vmatpush1.msra.mxu0 0.0
  %194 = vmatprep.subr.mxu0 0.0
  %195 = vmatpush1.msra.mxu0 0.0
  %196 = vmatprep.subr.mxu0 0.0
  %197 = vmatpush1.msra.mxu0 0.0
  %198 = vmatprep.subr.mxu0 0.0
  %199 = vmatpush1.msra.mxu0 0.0
  %200 = vmatprep.subr.mxu0 0.0
  %201 = vmatpush1.msra.mxu0 0.0
  %202 = vmatprep.subr.mxu0 0.0
  %203 = vmatpush1.msra.mxu0 0.0
  %204 = vmatprep.subr.mxu0 0.0
  %205 = vmatpush1.msra.mxu0 0.0
  %206 = vmatprep.subr.mxu0 0.0
  %207 = vmatpush1.msra.mxu0 0.0
  %208 = vmatprep.subr.mxu0 0.0
  %209 = vmatpush1.msra.mxu0 0.0
  %210 = vmatprep.subr.mxu0 0.0
  %211 = vmatpush1.msra.mxu0 0.0
  %212 = vmatprep.subr.mxu0 0.0
  %213 = vmatpush1.msra.mxu0 0.0
  %214 = vmatprep.subr.mxu0 0.0
  %215 = vmatpush1.msra.mxu0 0.0
  %216 = vmatprep.subr.mxu0 0.0
  %217 = vmatpush1.msra.mxu0 0.0
  %218 = vmatprep.subr.mxu0 0.0
  %219 = vmatpush1.msra.mxu0 %v186
  %220 = vmatprep.subr.mxu0 0.0
  %221 = vmatpush2.msra.mxu0 0.0
  %222 = vmatprep.subr.mxu0 0.0
  %223 = vmatpush2.msra.mxu0 0.0
  %224 = vmatprep.subr.mxu0 0.0
  %225 = vmatpush2.msra.mxu0 0.0
  %226 = vmatprep.subr.mxu0 0.0
  %227 = vmatpush2.msra.mxu0 0.0
  %228 = vmatprep.subr.mxu0 0.0
  %229 = vmatpush2.msra.mxu0 0.0
  %230 = vmatprep.subr.mxu0 0.0
  %231 = vmatpush2.msra.mxu0 0.0
  %232 = vmatprep.subr.mxu0 0.0
  %233 = vmatpush2.msra.mxu0 0.0
  %234 = vmatprep.subr.mxu0 0.0
  %235 = vmatpush2.msra.mxu0 0.0
  %236 = vmatprep.subr.mxu0 0.0
  %237 = vmatpush2.msra.mxu0 0.0
  %238 = vmatprep.subr.mxu0 0.0
  %239 = vmatpush2.msra.mxu0 0.0
  %240 = vmatprep.subr.mxu0 0.0
  %241 = vmatpush2.msra.mxu0 0.0
  %242 = vmatprep.subr.mxu0 0.0
  %243 = vmatpush2.msra.mxu0 0.0
  %244 = vmatprep.subr.mxu0 0.0
  %245 = vmatpush2.msra.mxu0 0.0
  %246 = vmatprep.subr.mxu0 0.0
  %247 = vmatpush2.msra.mxu0 0.0
  %248 = vmatprep.subr.mxu0 0.0
  %249 = vmatpush2.msra.mxu0 0.0
  %250 = vmatprep.subr.mxu0 0.0
  %251 = vmatpush2.msra.mxu0 0.0
  %252 = vmatprep.mubr.f32.mxu0 0.0
  %253 = vmatmul.mubr.f32.gmra.mxu0 %v140
  %v254 = vpop.f32.mrf.mxu0
  %v255 = vadd.f32 %v66, %v254
  %v256 = vpop.f32.mrf.mxu0
  %257 = vmatprep.mubr.f32.mxu0 0.0
  %258 = vmatmul.mubr.f32.gmra.mxu0 %v143
  %v259 = vpop.f32.mrf.mxu0
  %v260 = vadd.f32 %v71, %v259
  %v261 = vpop.f32.mrf.mxu0
  %262 = vmatprep.mubr.f32.mxu0 0.0
  %263 = vmatmul.mubr.f32.gmra.mxu0 %v146
  %v264 = vpop.f32.mrf.mxu0
  %v265 = vadd.f32 %v76, %v264
  %v266 = vpop.f32.mrf.mxu0
  %267 = vmatprep.mubr.f32.mxu0 0.0
  %268 = vmatmul.mubr.f32.gmra.mxu0 %v149
  %v269 = vpop.f32.mrf.mxu0
  %v270 = vadd.f32 %v81, %v269
  %v271 = vpop.f32.mrf.mxu0
  %272 = vmatprep.mubr.f32.mxu0 0.0
  %273 = vmatmul.mubr.f32.gmra.mxu0 %v152
  %v274 = vpop.f32.mrf.mxu0
  %v275 = vadd.f32 %v86, %v274
  %v276 = vpop.f32.mrf.mxu0
  %277 = vmatprep.mubr.f32.mxu0 0.0
  %278 = vmatmul.mubr.f32.gmra.mxu0 %v155
  %v279 = vpop.f32.mrf.mxu0
  %v280 = vadd.f32 %v91, %v279
  %v281 = vpop.f32.mrf.mxu0
  %282 = vmatprep.mubr.f32.mxu0 0.0
  %283 = vmatmul.mubr.f32.gmra.mxu0 %v158
  %v284 = vpop.f32.mrf.mxu0
  %v285 = vadd.f32 %v96, %v284
  %v286 = vpop.f32.mrf.mxu0
  %287 = vmatprep.mubr.f32.mxu0 0.0
  %288 = vmatmul.mubr.f32.gmra.mxu0 %v161
  %v289 = vpop.f32.mrf.mxu0
  %v290 = vadd.f32 %v101, %v289
  %v291 = vpop.f32.mrf.mxu0
  %292 = vmatprep.mubr.f32.mxu0 0.0
  %293 = vmatmul.mubr.f32.gmra.mxu0 %v164
  %v294 = vpop.f32.mrf.mxu0
  %v295 = vadd.f32 %v106, %v294
  %v296 = vpop.f32.mrf.mxu0
  %297 = vmatprep.mubr.f32.mxu0 0.0
  %298 = vmatmul.mubr.f32.gmra.mxu0 %v167
  %v299 = vpop.f32.mrf.mxu0
  %v300 = vadd.f32 %v111, %v299
  %v301 = vpop.f32.mrf.mxu0
  %302 = vmatprep.mubr.f32.mxu0 0.0
  %303 = vmatmul.mubr.f32.gmra.mxu0 %v170
  %v304 = vpop.f32.mrf.mxu0
  %v305 = vadd.f32 %v116, %v304
  %v306 = vpop.f32.mrf.mxu0
  %307 = vmatprep.mubr.f32.mxu0 0.0
  %308 = vmatmul.mubr.f32.gmra.mxu0 %v173
  %v309 = vpop.f32.mrf.mxu0
  %v310 = vadd.f32 %v121, %v309
  %v311 = vpop.f32.mrf.mxu0
  %312 = vmatprep.mubr.f32.mxu0 0.0
  %313 = vmatmul.mubr.f32.gmra.mxu0 %v176
  %v314 = vpop.f32.mrf.mxu0
  %v315 = vadd.f32 %v126, %v314
  %v316 = vpop.f32.mrf.mxu0
  %317 = vmatprep.mubr.f32.mxu0 0.0
  %318 = vmatmul.mubr.f32.gmra.mxu0 %v179
  %v319 = vpop.f32.mrf.mxu0
  %v320 = vadd.f32 %v131, %v319
  %v321 = vpop.f32.mrf.mxu0
  %322 = vmatprep.mubr.f32.mxu0 0.0
  %323 = vmatmul.mubr.f32.gmra.mxu0 %v182
  %v324 = vpop.f32.mrf.mxu0
  %v325 = vadd.f32 %v136, %v324
  %v326 = vpop.f32.mrf.mxu0
  %327 = vdwg.mxu0
  %v328 = vmax.f32 %v255, 0.0
  %v329 = vmax.f32 %v260, 0.0
  %v330 = vmax.f32 %v265, 0.0
  %v331 = vmax.f32 %v270, 0.0
  %v332 = vmax.f32 %v275, 0.0
  %v333 = vmax.f32 %v280, 0.0
  %v334 = vmax.f32 %v285, 0.0
  %v335 = vmax.f32 %v290, 0.0
  %v336 = vmax.f32 %v295, 0.0
  %v337 = vmax.f32 %v300, 0.0
  %v338 = vmax.f32 %v305, 0.0
  %v339 = vmax.f32 %v310, 0.0
  %v340 = vmax.f32 %v315, 0.0
  %v341 = vmax.f32 %v320, 0.0
  %v342 = vmax.f32 %v325, 0.0
  %v343 = vld [vmem:[%s3] sm:$0xff]
  %v344 = vld [vmem:[%s3 + $0x8] sm:$0xff]
  %v345 = vld [vmem:[%s3 + $0x10] sm:$0xff]
  %v346 = vld [vmem:[%s3 + $0x18] sm:$0xff]
  %v347 = vld [vmem:[%s3 + $0x20] sm:$0xff]
  %v348 = vld [vmem:[%s3 + $0x28] sm:$0xff]
  %v349 = vld [vmem:[%s3 + $0x30] sm:$0xff]
  %v350 = vld [vmem:[%s3 + $0x38] sm:$0xf]
  %v351 = vld [vmem:[%s4] sm:$0xff]
  %v352 = vld [vmem:[%s4 + $0x8] sm:$0xff]
  %v353 = vld [vmem:[%s4 + $0x10] sm:$0xff]
  %v354 = vld [vmem:[%s4 + $0x18] sm:$0xff]
  %v355 = vld [vmem:[%s4 + $0x20] sm:$0xff]
  %v356 = vld [vmem:[%s4 + $0x28] sm:$0xff]
  %v357 = vld [vmem:[%s4 + $0x30] sm:$0xff]
  %v358 = vld [vmem:[%s4 + $0x38] sm:$0xf]
  %360 = vset.pattern.permute.xlu0 0
  %361 = vperm.xlu0 %360, %v351
  %v362 = vpop.permute.xlu0 %361
  %365 = vset.pattern.permute.xlu0 0
  %366 = vperm.xlu0 %365, %v352
  %v367 = vpop.permute.xlu0 %366
  %370 = vset.pattern.permute.xlu0 0
  %371 = vperm.xlu0 %370, %v353
  %v372 = vpop.permute.xlu0 %371
  %375 = vset.pattern.permute.xlu0 0
  %376 = vperm.xlu0 %375, %v354
  %v377 = vpop.permute.xlu0 %376
  %380 = vset.pattern.permute.xlu0 0
  %381 = vperm.xlu0 %380, %v355
  %v382 = vpop.permute.xlu0 %381
  %385 = vset.pattern.permute.xlu0 0
  %386 = vperm.xlu0 %385, %v356
  %v387 = vpop.permute.xlu0 %386
  %390 = vset.pattern.permute.xlu0 0
  %391 = vperm.xlu0 %390, %v357
  %v392 = vpop.permute.xlu0 %391
  %395 = vset.pattern.permute.xlu0 0
  %396 = vperm.xlu0 %395, %v358
  %v397 = vpop.permute.xlu0 %396
  %vm399 = vcmask 982016
  %v401 = vsel %vm399, %v343, 0
  %v404 = vsel %vm399, %v344, 0
  %v407 = vsel %vm399, %v345, 0
  %v410 = vsel %vm399, %v346, 0
  %v413 = vsel %vm399, %v347, 0
  %v416 = vsel %vm399, %v348, 0
  %v419 = vsel %vm399, %v349, 0
  %v422 = vsel %vm399, %v350, 0
  %424 = vmatprep.subr.mxu0 0.0
  %425 = vmatpush1.msra.mxu0 0.0
  %426 = vmatprep.subr.mxu0 0.0
  %427 = vmatpush1.msra.mxu0 %v342
  %428 = vmatprep.subr.mxu0 0.0
  %429 = vmatpush1.msra.mxu0 %v341
  %430 = vmatprep.subr.mxu0 0.0
  %431 = vmatpush1.msra.mxu0 %v340
  %432 = vmatprep.subr.mxu0 0.0
  %433 = vmatpush1.msra.mxu0 %v339
  %434 = vmatprep.subr.mxu0 0.0
  %435 = vmatpush1.msra.mxu0 %v338
  %436 = vmatprep.subr.mxu0 0.0
  %437 = vmatpush1.msra.mxu0 %v337
  %438 = vmatprep.subr.mxu0 0.0
  %439 = vmatpush1.msra.mxu0 %v336
  %440 = vmatprep.subr.mxu0 0.0
  %441 = vmatpush1.msra.mxu0 %v335
  %442 = vmatprep.subr.mxu0 0.0
  %443 = vmatpush1.msra.mxu0 %v334
  %444 = vmatprep.subr.mxu0 0.0
  %445 = vmatpush1.msra.mxu0 %v333
  %446 = vmatprep.subr.mxu0 0.0
  %447 = vmatpush1.msra.mxu0 %v332
  %448 = vmatprep.subr.mxu0 0.0
  %449 = vmatpush1.msra.mxu0 %v331
  %450 = vmatprep.subr.mxu0 0.0
  %451 = vmatpush1.msra.mxu0 %v330
  %452 = vmatprep.subr.mxu0 0.0
  %453 = vmatpush1.msra.mxu0 %v329
  %454 = vmatprep.subr.mxu0 0.0
  %455 = vmatpush1.msra.mxu0 %v328
  %456 = vmatprep.subr.mxu0 0.0
  %457 = vmatpush2.msra.mxu0 0.0
  %458 = vmatprep.subr.mxu0 0.0
  %459 = vmatpush2.msra.mxu0 0.0
  %460 = vmatprep.subr.mxu0 0.0
  %461 = vmatpush2.msra.mxu0 0.0
  %462 = vmatprep.subr.mxu0 0.0
  %463 = vmatpush2.msra.mxu0 0.0
  %464 = vmatprep.subr.mxu0 0.0
  %465 = vmatpush2.msra.mxu0 0.0
  %466 = vmatprep.subr.mxu0 0.0
  %467 = vmatpush2.msra.mxu0 0.0
  %468 = vmatprep.subr.mxu0 0.0
  %469 = vmatpush2.msra.mxu0 0.0
  %470 = vmatprep.subr.mxu0 0.0
  %471 = vmatpush2.msra.mxu0 0.0
  %472 = vmatprep.subr.mxu0 0.0
  %473 = vmatpush2.msra.mxu0 0.0
  %474 = vmatprep.subr.mxu0 0.0
  %475 = vmatpush2.msra.mxu0 0.0
  %476 = vmatprep.subr.mxu0 0.0
  %477 = vmatpush2.msra.mxu0 0.0
  %478 = vmatprep.subr.mxu0 0.0
  %479 = vmatpush2.msra.mxu0 0.0
  %480 = vmatprep.subr.mxu0 0.0
  %481 = vmatpush2.msra.mxu0 0.0
  %482 = vmatprep.subr.mxu0 0.0
  %483 = vmatpush2.msra.mxu0 0.0
  %484 = vmatprep.subr.mxu0 0.0
  %485 = vmatpush2.msra.mxu0 0.0
  %486 = vmatprep.subr.mxu0 0.0
  %487 = vmatpush2.msra.mxu0 0.0
  %488 = vmatprep.mubr.f32.mxu0 0.0
  %489 = vmatmul.mubr.f32.gmra.mxu0 %v401
  %v490 = vpop.f32.mrf.mxu0
  %v491 = vadd.f32 %v362, %v490
  %v492 = vpop.f32.mrf.mxu0
  %493 = vmatprep.mubr.f32.mxu0 0.0
  %494 = vmatmul.mubr.f32.gmra.mxu0 %v404
  %v495 = vpop.f32.mrf.mxu0
  %v496 = vadd.f32 %v367, %v495
  %v497 = vpop.f32.mrf.mxu0
  %498 = vmatprep.mubr.f32.mxu0 0.0
  %499 = vmatmul.mubr.f32.gmra.mxu0 %v407
  %v500 = vpop.f32.mrf.mxu0
  %v501 = vadd.f32 %v372, %v500
  %v502 = vpop.f32.mrf.mxu0
  %503 = vmatprep.mubr.f32.mxu0 0.0
  %504 = vmatmul.mubr.f32.gmra.mxu0 %v410
  %v505 = vpop.f32.mrf.mxu0
  %v506 = vadd.f32 %v377, %v505
  %v507 = vpop.f32.mrf.mxu0
  %508 = vmatprep.mubr.f32.mxu0 0.0
  %509 = vmatmul.mubr.f32.gmra.mxu0 %v413
  %v510 = vpop.f32.mrf.mxu0
  %v511 = vadd.f32 %v382, %v510
  %v512 = vpop.f32.mrf.mxu0
  %513 = vmatprep.mubr.f32.mxu0 0.0
  %514 = vmatmul.mubr.f32.gmra.mxu0 %v416
  %v515 = vpop.f32.mrf.mxu0
  %v516 = vadd.f32 %v387, %v515
  %v517 = vpop.f32.mrf.mxu0
  %518 = vmatprep.mubr.f32.mxu0 0.0
  %519 = vmatmul.mubr.f32.gmra.mxu0 %v419
  %v520 = vpop.f32.mrf.mxu0
  %v521 = vadd.f32 %v392, %v520
  %v522 = vpop.f32.mrf.mxu0
  %523 = vmatprep.mubr.f32.mxu0 0.0
  %524 = vmatmul.mubr.f32.gmra.mxu0 %v422
  %v525 = vpop.f32.mrf.mxu0
  %v526 = vadd.f32 %v397, %v525
  %v527 = vpop.f32.mrf.mxu0
  %528 = vdwg.mxu0
  %v529 = vmax.f32 %v491, 0.0
  %v530 = vmax.f32 %v496, 0.0
  %v531 = vmax.f32 %v501, 0.0
  %v532 = vmax.f32 %v506, 0.0
  %v533 = vmax.f32 %v511, 0.0
  %v534 = vmax.f32 %v516, 0.0
  %v535 = vmax.f32 %v521, 0.0
  %v536 = vmax.f32 %v526, 0.0
  %v537 = vld [vmem:[%s5] sm:$0xff]
  %v538 = vld [vmem:[%s5 + $0x8] sm:$0x3]
  %v539 = vld [vmem:[%s6] sm:$0xff]
  %v540 = vld [vmem:[%s6 + $0x8] sm:$0x3]
  %542 = vset.pattern.permute.xlu0 0
  %543 = vperm.xlu0 %542, %v539
  %v544 = vpop.permute.xlu0 %543
  %547 = vset.pattern.permute.xlu0 0
  %548 = vperm.xlu0 %547, %v540
  %v549 = vpop.permute.xlu0 %548
  %vm551 = vcmask 490496
  %v553 = vsel %vm551, %v537, 0
  %v556 = vsel %vm551, %v538, 0
  %vm558 = vcmask 1043456
  %v560 = vsel %vm558, %v536, 0
  %562 = vmatprep.subr.mxu0 0.0
  %563 = vmatpush1.msra.mxu0 0.0
  %564 = vmatprep.subr.mxu0 0.0
  %565 = vmatpush1.msra.mxu0 0.0
  %566 = vmatprep.subr.mxu0 0.0
  %567 = vmatpush1.msra.mxu0 0.0
  %568 = vmatprep.subr.mxu0 0.0
  %569 = vmatpush1.msra.mxu0 0.0
  %570 = vmatprep.subr.mxu0 0.0
  %571 = vmatpush1.msra.mxu0 0.0
  %572 = vmatprep.subr.mxu0 0.0
  %573 = vmatpush1.msra.mxu0 0.0
  %574 = vmatprep.subr.mxu0 0.0
  %575 = vmatpush1.msra.mxu0 0.0
  %576 = vmatprep.subr.mxu0 0.0
  %577 = vmatpush1.msra.mxu0 0.0
  %578 = vmatprep.subr.mxu0 0.0
  %579 = vmatpush1.msra.mxu0 %v560
  %580 = vmatprep.subr.mxu0 0.0
  %581 = vmatpush1.msra.mxu0 %v535
  %582 = vmatprep.subr.mxu0 0.0
  %583 = vmatpush1.msra.mxu0 %v534
  %584 = vmatprep.subr.mxu0 0.0
  %585 = vmatpush1.msra.mxu0 %v533
  %586 = vmatprep.subr.mxu0 0.0
  %587 = vmatpush1.msra.mxu0 %v532
  %588 = vmatprep.subr.mxu0 0.0
  %589 = vmatpush1.msra.mxu0 %v531
  %590 = vmatprep.subr.mxu0 0.0
  %591 = vmatpush1.msra.mxu0 %v530
  %592 = vmatprep.subr.mxu0 0.0
  %593 = vmatpush1.msra.mxu0 %v529
  %594 = vmatprep.subr.mxu0 0.0
  %595 = vmatpush2.msra.mxu0 0.0
  %596 = vmatprep.subr.mxu0 0.0
  %597 = vmatpush2.msra.mxu0 0.0
  %598 = vmatprep.subr.mxu0 0.0
  %599 = vmatpush2.msra.mxu0 0.0
  %600 = vmatprep.subr.mxu0 0.0
  %601 = vmatpush2.msra.mxu0 0.0
  %602 = vmatprep.subr.mxu0 0.0
  %603 = vmatpush2.msra.mxu0 0.0
  %604 = vmatprep.subr.mxu0 0.0
  %605 = vmatpush2.msra.mxu0 0.0
  %606 = vmatprep.subr.mxu0 0.0
  %607 = vmatpush2.msra.mxu0 0.0
  %608 = vmatprep.subr.mxu0 0.0
  %609 = vmatpush2.msra.mxu0 0.0
  %610 = vmatprep.subr.mxu0 0.0
  %611 = vmatpush2.msra.mxu0 0.0
  %612 = vmatprep.subr.mxu0 0.0
  %613 = vmatpush2.msra.mxu0 0.0
  %614 = vmatprep.subr.mxu0 0.0
  %615 = vmatpush2.msra.mxu0 0.0
  %616 = vmatprep.subr.mxu0 0.0
  %617 = vmatpush2.msra.mxu0 0.0
  %618 = vmatprep.subr.mxu0 0.0
  %619 = vmatpush2.msra.mxu0 0.0
  %620 = vmatprep.subr.mxu0 0.0
  %621 = vmatpush2.msra.mxu0 0.0
  %622 = vmatprep.subr.mxu0 0.0
  %623 = vmatpush2.msra.mxu0 0.0
  %624 = vmatprep.subr.mxu0 0.0
  %625 = vmatpush2.msra.mxu0 0.0
  %626 = vmatprep.mubr.f32.mxu0 0.0
  %627 = vmatmul.mubr.f32.gmra.mxu0 %v553
  %v628 = vpop.f32.mrf.mxu0
  %v629 = vadd.f32 %v544, %v628
  %v630 = vpop.f32.mrf.mxu0
  %631 = vmatprep.mubr.f32.mxu0 0.0
  %632 = vmatmul.mubr.f32.gmra.mxu0 %v556
  %v633 = vpop.f32.mrf.mxu0
  %v634 = vadd.f32 %v549, %v633
  %v635 = vpop.f32.mrf.mxu0
  %636 = vdwg.mxu0
  %v637 = vmax.f32 %v629, 0.0
  %v638 = vmax.f32 %v634, 0.0
  %v639 = vld [vmem:[%s7] sm:$0x3]
  %v640 = vld [vmem:[%s8] sm:$0x3]
  %642 = vset.pattern.permute.xlu0 0
  %643 = vperm.xlu0 %642, %v640
  %v644 = vpop.permute.xlu0 %643
  %vm646 = vcmask 80896
  %v648 = vsel %vm646, %v639, 0
  %vm650 = vcmask 1041408
  %v652 = vsel %vm650, %v638, 0
  %654 = vmatprep.subr.mxu0 0.0
  %655 = vmatpush1.msra.mxu0 0.0
  %656 = vmatprep.subr.mxu0 0.0
  %657 = vmatpush1.msra.mxu0 0.0
  %658 = vmatprep.subr.mxu0 0.0
  %659 = vmatpush1.msra.mxu0 0.0
  %660 = vmatprep.subr.mxu0 0.0
  %661 = vmatpush1.msra.mxu0 0.0
  %662 = vmatprep.subr.mxu0 0.0
  %663 = vmatpush1.msra.mxu0 0.0
  %664 = vmatprep.subr.mxu0 0.0
  %665 = vmatpush1.msra.mxu0 0.0
  %666 = vmatprep.subr.mxu0 0.0
  %667 = vmatpush1.msra.mxu0 0.0
  %668 = vmatprep.subr.mxu0 0.0
  %669 = vmatpush1.msra.mxu0 0.0
  %670 = vmatprep.subr.mxu0 0.0
  %671 = vmatpush1.msra.mxu0 0.0
  %672 = vmatprep.subr.mxu0 0.0
  %673 = vmatpush1.msra.mxu0 0.0
  %674 = vmatprep.subr.mxu0 0.0
  %675 = vmatpush1.msra.mxu0 0.0
  %676 = vmatprep.subr.mxu0 0.0
  %677 = vmatpush1.msra.mxu0 0.0
  %678 = vmatprep.subr.mxu0 0.0
  %679 = vmatpush1.msra.mxu0 0.0
  %680 = vmatprep.subr.mxu0 0.0
  %681 = vmatpush1.msra.mxu0 0.0
  %682 = vmatprep.subr.mxu0 0.0
  %683 = vmatpush1.msra.mxu0 %v652
  %684 = vmatprep.subr.mxu0 0.0
  %685 = vmatpush1.msra.mxu0 %v637
  %686 = vmatprep.subr.mxu0 0.0
  %687 = vmatpush2.msra.mxu0 0.0
  %688 = vmatprep.subr.mxu0 0.0
  %689 = vmatpush2.msra.mxu0 0.0
  %690 = vmatprep.subr.mxu0 0.0
  %691 = vmatpush2.msra.mxu0 0.0
  %692 = vmatprep.subr.mxu0 0.0
  %693 = vmatpush2.msra.mxu0 0.0
  %694 = vmatprep.subr.mxu0 0.0
  %695 = vmatpush2.msra.mxu0 0.0
  %696 = vmatprep.subr.mxu0 0.0
  %697 = vmatpush2.msra.mxu0 0.0
  %698 = vmatprep.subr.mxu0 0.0
  %699 = vmatpush2.msra.mxu0 0.0
  %700 = vmatprep.subr.mxu0 0.0
  %701 = vmatpush2.msra.mxu0 0.0
  %702 = vmatprep.subr.mxu0 0.0
  %703 = vmatpush2.msra.mxu0 0.0
  %704 = vmatprep.subr.mxu0 0.0
  %705 = vmatpush2.msra.mxu0 0.0
  %706 = vmatprep.subr.mxu0 0.0
  %707 = vmatpush2.msra.mxu0 0.0
  %708 = vmatprep.subr.mxu0 0.0
  %709 = vmatpush2.msra.mxu0 0.0
  %710 = vmatprep.subr.mxu0 0.0
  %711 = vmatpush2.msra.mxu0 0.0
  %712 = vmatprep.subr.mxu0 0.0
  %713 = vmatpush2.msra.mxu0 0.0
  %714 = vmatprep.subr.mxu0 0.0
  %715 = vmatpush2.msra.mxu0 0.0
  %716 = vmatprep.subr.mxu0 0.0
  %717 = vmatpush2.msra.mxu0 0.0
  %718 = vmatprep.mubr.f32.mxu0 0.0
  %719 = vmatmul.mubr.f32.gmra.mxu0 %v648
  %v720 = vpop.f32.mrf.mxu0
  %v721 = vadd.f32 %v644, %v720
  %v722 = vpop.f32.mrf.mxu0
  %723 = vdwg.mxu0
  %v724 = vadd.f32 %v721, 0.001
  %vm725 = vcmp.gt.f32.partialorder %v724, 0.0
  %v726 = vmin.f32 %v724, 0.0
  %v727 = vmul.f32 %v726, 1.442695
  %v728 = vpow.pop %v727
  %v729 = vsub.f32 %v728, 1.0
  %v730 = vsel %vm725, %v724, %v729
  %v731 = vadd.f32 %v730, 1.0
  %v732 = vadd.f32 %v731, 1e-07
  %733 = vst [vmem:[%s9] sm:$0x1] %v721
  %734 = vst [vmem:[%s9] sm:$0x2] %v732
  // Predicated region
  $region38: #{umal_forward.1} parent=0 // pred_check
    _
  $region39: #{umal_forward.1} parent=0 // pred_check_branch
    %736 = sbr.rel (0) target = $region41
  $region40: #{umal_forward.1} parent=0 // pred_region
    _
  $region41: #{umal_forward.1} parent=0 // pred_fallthru
    _
  // Predicated region
  $region42: #{umal_forward.1} parent=0 // pred_check
    _
  $region43: #{umal_forward.1} parent=0 // pred_check_branch
    %738 = sbr.rel (0) target = $region45
  $region44: #{umal_forward.1} parent=0 // pred_region
    _
  $region45: #{umal_forward.1} parent=0 // pred_fallthru
    _

</llo_original>
